<compile_context>
chip_gen: v7x
topology: tpu7x:2x2x1
jax: 0.10.0
libtpu: 0.0.40
codegen_flags: <defaults>
</compile_context>

<pallas_src>
import functools

import jax
import jax.numpy as jnp
from jax.experimental import pallas as pl
from jax.experimental.pallas import tpu as pltpu


def rk4_kernel(scale_ref, xt_ref, w1_ref, b1_ref, w2_ref, b2_ref, w3_ref,
               b3_ref, ot_ref):
    # Transposed, lane-dense layout: activations are (features, TILE_B), so
    # the batch lives on the 128-wide lane axis.
    xt = xt_ref[...]                                   # (D, TB)
    w1, w2, w3 = w1_ref[...], w2_ref[...], w3_ref[...]  # [out, in]
    b1, b2, b3 = b1_ref[...], b2_ref[...], b3_ref[...]  # (out, 1) lane-bcast
    scale = scale_ref[0, 0]                            # h / 6 (host-precomputed)

    def mlp(z):                                        # z: (D, TB)
        z = jnp.tanh(z)
        z = jnp.tanh(jnp.dot(w1, z, preferred_element_type=jnp.float32) + b1)
        z = jnp.tanh(jnp.dot(w2, z, preferred_element_type=jnp.float32) + b2)
        return jnp.dot(w3, z, preferred_element_type=jnp.float32) + b3

    k1 = mlp(xt)
    k2 = mlp(xt + 0.5 * k1)
    k3 = mlp(xt + 0.5 * k2)
    k4 = mlp(xt + k3)

    ot_ref[...] = xt + scale * (k1 + 2.0 * (k2 + k3) + k4)


@functools.partial(jax.jit, static_argnames=("tile_b",))
def _rk4_call(xt, scale, params, tile_b):
    w1, b1, w2, b2, w3, b3 = params        # W: [out, in], b: [out, 1]
    d, b = xt.shape
    h1 = w1.shape[0]
    h2 = w2.shape[0]
    grid = (pl.cdiv(b, tile_b),)

    # Weights/biases: constant index_map => DMA'd once, resident in VMEM.
    const = lambda i: (0, 0)
    in_specs = [
        pl.BlockSpec((1, 1), const, memory_space=pltpu.MemorySpace.SMEM),
        pl.BlockSpec((d, tile_b), lambda i: (0, i)),
        pl.BlockSpec(w1.shape, const),
        pl.BlockSpec(b1.shape, const),
        pl.BlockSpec(w2.shape, const),
        pl.BlockSpec(b2.shape, const),
        pl.BlockSpec(w3.shape, const),
        pl.BlockSpec(b3.shape, const),
    ]
    out_specs = pl.BlockSpec((d, tile_b), lambda i: (0, i))

    # Advisory cost estimate (on the true batch: no padding copy anymore).
    flops_per_col = 4 * 2 * (d * h1 + h1 * h2 + h2 * d) + 12 * d
    transc_per_col = 4 * (d + h1 + h2)
    weight_bytes = 4 * (d * h1 + h1 * h2 + h2 * d + h1 + h2 + d)
    cost = pl.CostEstimate(
        flops=b * flops_per_col,
        transcendentals=b * transc_per_col,
        bytes_accessed=2 * b * d * 4 + weight_bytes,
    )

    return pl.pallas_call(
        rk4_kernel,
        out_shape=jax.ShapeDtypeStruct(xt.shape, xt.dtype),
        grid=grid,
        in_specs=in_specs,
        out_specs=out_specs,
        compiler_params=pltpu.CompilerParams(
            dimension_semantics=("parallel",)),
        cost_estimate=cost,
    )(scale, xt, w1, b1, w2, b2, w3, b3)


def rk4_forward(x, t, h, params, tile_b=2048):
    """Pallas equivalent of rk4.forward(x, t, h).

    `t` is unused: the inner model has time_lag='uniform', so dt is ignored.
    x is [batch, dim]; the wrapper transposes to the kernel's lane-dense
    (dim, batch) layout and back (layout plumbing only).
    """
    del t
    b, d = x.shape

    if b <= tile_b:
        # Single grid step with a full-extent block (no divisibility rules,
        # no padding, no grid overhead).
        tile_b = b
    else:
        # Lane dim of the block must be a multiple of 128; the ragged last
        # block is handled by Pallas (OOB columns are garbage but dropped).
        tile_b = max(128, (tile_b // 128) * 128)

    xt = x.T                                            # (D, B): batch on lanes
    scale = jnp.full((1, 1), h / 6.0, dtype=jnp.float32)
    out_t = _rk4_call(xt, scale, params, tile_b)
    return out_t.T


def init_params(key, layers):
    """Matches model.__init__: N(0,1) weights, zero bias, PyTorch [out, in]."""
    ks = jax.random.split(key, len(layers) - 1)
    params = []
    for i in range(len(layers) - 1):
        w = jax.random.normal(ks[i], (layers[i + 1], layers[i]), jnp.float32)
        b = jnp.zeros((layers[i + 1], 1), jnp.float32)
        params.extend([w, b])
    return tuple(params)


def _mlp_ref(z, params):
    w1, b1, w2, b2, w3, b3 = params        # [out, in]
    z = jnp.tanh(z)
    z = jnp.tanh(z @ w1.T + b1.T)
    z = jnp.tanh(z @ w2.T + b2.T)
    return z @ w3.T + b3.T


def rk4_ref(x, h, params):
    k1 = _mlp_ref(x, params)
    k2 = _mlp_ref(x + 0.5 * k1, params)
    k3 = _mlp_ref(x + 0.5 * k2, params)
    k4 = _mlp_ref(x + k3, params)
    return x + (h / 6.0) * (k1 + 2.0 * k2 + 2.0 * k3 + k4)


if __name__ == "__main__":
    # layers = [4, 32, 32, 4], tanh activation.
    layers = [4, 32, 32, 4]

    key = jax.random.PRNGKey(0)
    k_x, k_x2, k_x3, k_p = jax.random.split(key, 4)
    params = init_params(k_p, layers)

    t = 0.0   # unused (uniform time lag)
    h = 0.1

    # Batched case: 256 states -> single grid step (tile == batch), lane-dense.
    x = jax.random.normal(k_x, (256, layers[0]), jnp.float32)
    y = jax.block_until_ready(rk4_forward(x, t, h, params))
    y_ref = rk4_ref(x, h, params)
    assert y.shape == x.shape and y.dtype == x.dtype
    assert jnp.allclose(y, y_ref, rtol=1e-5, atol=1e-5)

    # Small batch (10): full-extent block, single step, no padding.
    x2 = jax.random.normal(k_x2, (10, layers[0]), jnp.float32)
    y2 = jax.block_until_ready(rk4_forward(x2, t, h, params))
    y2_ref = rk4_ref(x2, h, params)
    assert y2.shape == x2.shape
    assert jnp.allclose(y2, y2_ref, rtol=1e-5, atol=1e-5)

    # Ragged multi-step grid (300 rows, tile 128 -> 3 steps, last block partial):
    # exercises the OOB-garbage-column path and v7x multi-core sharding.
    x3 = jax.random.normal(k_x3, (300, layers[0]), jnp.float32)
    y3 = jax.block_until_ready(rk4_forward(x3, t, h, params, tile_b=128))
    y3_ref = rk4_ref(x3, h, params)
    assert y3.shape == x3.shape
    assert jnp.allclose(y3, y3_ref, rtol=1e-5, atol=1e-5)

    print("KERNEL_OK")
</pallas_src>

<mosaic_0001>
module attributes {stable_mosaic.version = 11 : i64} {
  func.func @rk4_kernel(%arg0: i32, %arg1: memref<1x1xf32, #tpu.memory_space<smem>>, %arg2: memref<4x256xf32, #tpu.memory_space<vmem>>, %arg3: memref<32x4xf32, #tpu.memory_space<vmem>>, %arg4: memref<32x1xf32, #tpu.memory_space<vmem>>, %arg5: memref<32x32xf32, #tpu.memory_space<vmem>>, %arg6: memref<32x1xf32, #tpu.memory_space<vmem>>, %arg7: memref<4x32xf32, #tpu.memory_space<vmem>>, %arg8: memref<4x1xf32, #tpu.memory_space<vmem>>, %arg9: memref<4x256xf32, #tpu.memory_space<vmem>>) attributes {dimension_semantics = [#tpu.dimension_semantics<parallel>], iteration_bounds = array<i64: 1>, scalar_prefetch = 0 : i64, scratch_operands = 0 : i64, tpu.core_type = #tpu.core_type<tc>, window_params = [{transform_indices = @transform_0, window_bounds = array<i64: 1, 1>}, {transform_indices = @transform_1, window_bounds = array<i64: 4, 256>}, {pipeline_mode = #tpu.pipeline_mode<synchronous>, transform_indices = @transform_2, window_bounds = array<i64: 32, 4>}, {pipeline_mode = #tpu.pipeline_mode<synchronous>, transform_indices = @transform_3, window_bounds = array<i64: 32, 1>}, {pipeline_mode = #tpu.pipeline_mode<synchronous>, transform_indices = @transform_4, window_bounds = array<i64: 32, 32>}, {pipeline_mode = #tpu.pipeline_mode<synchronous>, transform_indices = @transform_5, window_bounds = array<i64: 32, 1>}, {pipeline_mode = #tpu.pipeline_mode<synchronous>, transform_indices = @transform_6, window_bounds = array<i64: 4, 32>}, {pipeline_mode = #tpu.pipeline_mode<synchronous>, transform_indices = @transform_7, window_bounds = array<i64: 4, 1>}, {transform_indices = @transform_8, window_bounds = array<i64: 4, 256>}]} {
    %c0 = arith.constant 0 : index
    %c0_0 = arith.constant 0 : index
    %0 = vector.load %arg2[%c0, %c0_0] : memref<4x256xf32, #tpu.memory_space<vmem>>, vector<4x256xf32>
    %c0_1 = arith.constant 0 : index
    %c0_2 = arith.constant 0 : index
    %1 = vector.load %arg3[%c0_1, %c0_2] : memref<32x4xf32, #tpu.memory_space<vmem>>, vector<32x4xf32>
    %c0_3 = arith.constant 0 : index
    %c0_4 = arith.constant 0 : index
    %2 = vector.load %arg5[%c0_3, %c0_4] : memref<32x32xf32, #tpu.memory_space<vmem>>, vector<32x32xf32>
    %c0_5 = arith.constant 0 : index
    %c0_6 = arith.constant 0 : index
    %3 = vector.load %arg7[%c0_5, %c0_6] : memref<4x32xf32, #tpu.memory_space<vmem>>, vector<4x32xf32>
    %c0_7 = arith.constant 0 : index
    %c0_8 = arith.constant 0 : index
    %4 = vector.load %arg4[%c0_7, %c0_8] : memref<32x1xf32, #tpu.memory_space<vmem>>, vector<32x1xf32>
    %c0_9 = arith.constant 0 : index
    %c0_10 = arith.constant 0 : index
    %5 = vector.load %arg6[%c0_9, %c0_10] : memref<32x1xf32, #tpu.memory_space<vmem>>, vector<32x1xf32>
    %c0_11 = arith.constant 0 : index
    %c0_12 = arith.constant 0 : index
    %6 = vector.load %arg8[%c0_11, %c0_12] : memref<4x1xf32, #tpu.memory_space<vmem>>, vector<4x1xf32>
    %c0_13 = arith.constant 0 : index
    %c0_14 = arith.constant 0 : index
    %7 = memref.load %arg1[%c0_13, %c0_14] : memref<1x1xf32, #tpu.memory_space<smem>>
    %8 = math.tanh %0 : vector<4x256xf32>
    %cst = arith.constant dense<0.000000e+00> : vector<32x256xf32>
    %9 = tpu.matmul %1, %8, %cst {dimension_numbers = #tpu.dot_dimension_numbers<[1], [0], [0], [1], [0, 0, 1, 1], [], []>} : vector<32x4xf32>, vector<4x256xf32>, vector<32x256xf32> -> vector<32x256xf32>
    %10 = vector.broadcast %4 : vector<32x1xf32> to vector<32x256xf32>
    %11 = arith.addf %9, %10 : vector<32x256xf32>
    %12 = math.tanh %11 : vector<32x256xf32>
    %cst_15 = arith.constant dense<0.000000e+00> : vector<32x256xf32>
    %13 = tpu.matmul %2, %12, %cst_15 {dimension_numbers = #tpu.dot_dimension_numbers<[1], [0], [0], [1], [0, 0, 1, 1], [], []>} : vector<32x32xf32>, vector<32x256xf32>, vector<32x256xf32> -> vector<32x256xf32>
    %14 = vector.broadcast %5 : vector<32x1xf32> to vector<32x256xf32>
    %15 = arith.addf %13, %14 : vector<32x256xf32>
    %16 = math.tanh %15 : vector<32x256xf32>
    %cst_16 = arith.constant dense<0.000000e+00> : vector<4x256xf32>
    %17 = tpu.matmul %3, %16, %cst_16 {dimension_numbers = #tpu.dot_dimension_numbers<[1], [0], [0], [1], [0, 0, 1, 1], [], []>} : vector<4x32xf32>, vector<32x256xf32>, vector<4x256xf32> -> vector<4x256xf32>
    %18 = vector.broadcast %6 : vector<4x1xf32> to vector<4x256xf32>
    %19 = arith.addf %17, %18 : vector<4x256xf32>
    %cst_17 = arith.constant 5.000000e-01 : f32
    %20 = vector.broadcast %cst_17 : f32 to vector<4x256xf32>
    %21 = arith.mulf %20, %19 : vector<4x256xf32>
    %22 = arith.addf %0, %21 : vector<4x256xf32>
    %23 = math.tanh %22 : vector<4x256xf32>
    %cst_18 = arith.constant dense<0.000000e+00> : vector<32x256xf32>
    %24 = tpu.matmul %1, %23, %cst_18 {dimension_numbers = #tpu.dot_dimension_numbers<[1], [0], [0], [1], [0, 0, 1, 1], [], []>} : vector<32x4xf32>, vector<4x256xf32>, vector<32x256xf32> -> vector<32x256xf32>
    %25 = vector.broadcast %4 : vector<32x1xf32> to vector<32x256xf32>
    %26 = arith.addf %24, %25 : vector<32x256xf32>
    %27 = math.tanh %26 : vector<32x256xf32>
    %cst_19 = arith.constant dense<0.000000e+00> : vector<32x256xf32>
    %28 = tpu.matmul %2, %27, %cst_19 {dimension_numbers = #tpu.dot_dimension_numbers<[1], [0], [0], [1], [0, 0, 1, 1], [], []>} : vector<32x32xf32>, vector<32x256xf32>, vector<32x256xf32> -> vector<32x256xf32>
    %29 = vector.broadcast %5 : vector<32x1xf32> to vector<32x256xf32>
    %30 = arith.addf %28, %29 : vector<32x256xf32>
    %31 = math.tanh %30 : vector<32x256xf32>
    %cst_20 = arith.constant dense<0.000000e+00> : vector<4x256xf32>
    %32 = tpu.matmul %3, %31, %cst_20 {dimension_numbers = #tpu.dot_dimension_numbers<[1], [0], [0], [1], [0, 0, 1, 1], [], []>} : vector<4x32xf32>, vector<32x256xf32>, vector<4x256xf32> -> vector<4x256xf32>
    %33 = vector.broadcast %6 : vector<4x1xf32> to vector<4x256xf32>
    %34 = arith.addf %32, %33 : vector<4x256xf32>
    %cst_21 = arith.constant 5.000000e-01 : f32
    %35 = vector.broadcast %cst_21 : f32 to vector<4x256xf32>
    %36 = arith.mulf %35, %34 : vector<4x256xf32>
    %37 = arith.addf %0, %36 : vector<4x256xf32>
    %38 = math.tanh %37 : vector<4x256xf32>
    %cst_22 = arith.constant dense<0.000000e+00> : vector<32x256xf32>
    %39 = tpu.matmul %1, %38, %cst_22 {dimension_numbers = #tpu.dot_dimension_numbers<[1], [0], [0], [1], [0, 0, 1, 1], [], []>} : vector<32x4xf32>, vector<4x256xf32>, vector<32x256xf32> -> vector<32x256xf32>
    %40 = vector.broadcast %4 : vector<32x1xf32> to vector<32x256xf32>
    %41 = arith.addf %39, %40 : vector<32x256xf32>
    %42 = math.tanh %41 : vector<32x256xf32>
    %cst_23 = arith.constant dense<0.000000e+00> : vector<32x256xf32>
    %43 = tpu.matmul %2, %42, %cst_23 {dimension_numbers = #tpu.dot_dimension_numbers<[1], [0], [0], [1], [0, 0, 1, 1], [], []>} : vector<32x32xf32>, vector<32x256xf32>, vector<32x256xf32> -> vector<32x256xf32>
    %44 = vector.broadcast %5 : vector<32x1xf32> to vector<32x256xf32>
    %45 = arith.addf %43, %44 : vector<32x256xf32>
    %46 = math.tanh %45 : vector<32x256xf32>
    %cst_24 = arith.constant dense<0.000000e+00> : vector<4x256xf32>
    %47 = tpu.matmul %3, %46, %cst_24 {dimension_numbers = #tpu.dot_dimension_numbers<[1], [0], [0], [1], [0, 0, 1, 1], [], []>} : vector<4x32xf32>, vector<32x256xf32>, vector<4x256xf32> -> vector<4x256xf32>
    %48 = vector.broadcast %6 : vector<4x1xf32> to vector<4x256xf32>
    %49 = arith.addf %47, %48 : vector<4x256xf32>
    %50 = arith.addf %0, %49 : vector<4x256xf32>
    %51 = math.tanh %50 : vector<4x256xf32>
    %cst_25 = arith.constant dense<0.000000e+00> : vector<32x256xf32>
    %52 = tpu.matmul %1, %51, %cst_25 {dimension_numbers = #tpu.dot_dimension_numbers<[1], [0], [0], [1], [0, 0, 1, 1], [], []>} : vector<32x4xf32>, vector<4x256xf32>, vector<32x256xf32> -> vector<32x256xf32>
    %53 = vector.broadcast %4 : vector<32x1xf32> to vector<32x256xf32>
    %54 = arith.addf %52, %53 : vector<32x256xf32>
    %55 = math.tanh %54 : vector<32x256xf32>
    %cst_26 = arith.constant dense<0.000000e+00> : vector<32x256xf32>
    %56 = tpu.matmul %2, %55, %cst_26 {dimension_numbers = #tpu.dot_dimension_numbers<[1], [0], [0], [1], [0, 0, 1, 1], [], []>} : vector<32x32xf32>, vector<32x256xf32>, vector<32x256xf32> -> vector<32x256xf32>
    %57 = vector.broadcast %5 : vector<32x1xf32> to vector<32x256xf32>
    %58 = arith.addf %56, %57 : vector<32x256xf32>
    %59 = math.tanh %58 : vector<32x256xf32>
    %cst_27 = arith.constant dense<0.000000e+00> : vector<4x256xf32>
    %60 = tpu.matmul %3, %59, %cst_27 {dimension_numbers = #tpu.dot_dimension_numbers<[1], [0], [0], [1], [0, 0, 1, 1], [], []>} : vector<4x32xf32>, vector<32x256xf32>, vector<4x256xf32> -> vector<4x256xf32>
    %61 = vector.broadcast %6 : vector<4x1xf32> to vector<4x256xf32>
    %62 = arith.addf %60, %61 : vector<4x256xf32>
    %63 = arith.addf %34, %49 : vector<4x256xf32>
    %cst_28 = arith.constant 2.000000e+00 : f32
    %64 = vector.broadcast %cst_28 : f32 to vector<4x256xf32>
    %65 = arith.mulf %64, %63 : vector<4x256xf32>
    %66 = arith.addf %19, %65 : vector<4x256xf32>
    %67 = arith.addf %66, %62 : vector<4x256xf32>
    %68 = vector.broadcast %7 : f32 to vector<4x256xf32>
    %69 = arith.mulf %68, %67 : vector<4x256xf32>
    %70 = arith.addf %0, %69 : vector<4x256xf32>
    %c0_29 = arith.constant 0 : index
    %c0_30 = arith.constant 0 : index
    %71 = vector.load %arg9[%c0_29, %c0_30] : memref<4x256xf32, #tpu.memory_space<vmem>>, vector<4x256xf32>
    tpu.vector_store %arg9[%c0_29, %c0_30], %70 {strides = array<i32>} : memref<4x256xf32, #tpu.memory_space<vmem>>, vector<4x256xf32>,
    return
  }
  func.func @transform_0(%arg0: i32) -> (i32, i32) {
    %c0_i32 = arith.constant 0 : i32
    %c0_i32_0 = arith.constant 0 : i32
    %c0_i32_1 = arith.constant 0 : i32
    return %c0_i32, %c0_i32_0 : i32, i32
  }
  func.func @transform_1(%arg0: i32) -> (i32, i32) {
    %c0_i32 = arith.constant 0 : i32
    %c0_i32_0 = arith.constant 0 : i32
    return %c0_i32, %arg0 : i32, i32
  }
  func.func @transform_2(%arg0: i32) -> (i32, i32) {
    %c0_i32 = arith.constant 0 : i32
    %c0_i32_0 = arith.constant 0 : i32
    %c0_i32_1 = arith.constant 0 : i32
    return %c0_i32, %c0_i32_0 : i32, i32
  }
  func.func @transform_3(%arg0: i32) -> (i32, i32) {
    %c0_i32 = arith.constant 0 : i32
    %c0_i32_0 = arith.constant 0 : i32
    %c0_i32_1 = arith.constant 0 : i32
    return %c0_i32, %c0_i32_0 : i32, i32
  }
  func.func @transform_4(%arg0: i32) -> (i32, i32) {
    %c0_i32 = arith.constant 0 : i32
    %c0_i32_0 = arith.constant 0 : i32
    %c0_i32_1 = arith.constant 0 : i32
    return %c0_i32, %c0_i32_0 : i32, i32
  }
  func.func @transform_5(%arg0: i32) -> (i32, i32) {
    %c0_i32 = arith.constant 0 : i32
    %c0_i32_0 = arith.constant 0 : i32
    %c0_i32_1 = arith.constant 0 : i32
    return %c0_i32, %c0_i32_0 : i32, i32
  }
  func.func @transform_6(%arg0: i32) -> (i32, i32) {
    %c0_i32 = arith.constant 0 : i32
    %c0_i32_0 = arith.constant 0 : i32
    %c0_i32_1 = arith.constant 0 : i32
    return %c0_i32, %c0_i32_0 : i32, i32
  }
  func.func @transform_7(%arg0: i32) -> (i32, i32) {
    %c0_i32 = arith.constant 0 : i32
    %c0_i32_0 = arith.constant 0 : i32
    %c0_i32_1 = arith.constant 0 : i32
    return %c0_i32, %c0_i32_0 : i32, i32
  }
  func.func @transform_8(%arg0: i32) -> (i32, i32) {
    %c0_i32 = arith.constant 0 : i32
    %c0_i32_0 = arith.constant 0 : i32
    return %c0_i32, %arg0 : i32, i32
  }
}

</mosaic_0001>

<llo_original>
// kernel: _rk4_call.1
$region0: #{_rk4_call.1}
  #allocation0 [shape = 'u32[]', space=smem, size = 0x4, offset = 0x4, fixed_abs, tag = 'smem constant byte address 0x4 - core index']
  #allocation1 [shape = 'u32[144,128]{1,0:T(1,128)}', space=vmem, size = 0x12000, scoped, tag = 'internal scratch']
  #allocation2 [shape = 'f32[1,1]{1,0:T(1,128)S(6)}', space=smem, size = 0x200, scoped, tag = 'scoped memory for _rk4_call.1']
  %s0 = inlined_call_operand.<no memory space> [shape: f32[1,1], index: 0, kind: input, shape index: {}]
  %s1 = inlined_call_operand.vmem [shape: f32[4,256], index: 1, kind: input, shape index: {}]
  %s2 = inlined_call_operand.vmem [shape: f32[32,4], index: 2, kind: input, shape index: {}]
  %s3 = inlined_call_operand.vmem [shape: f32[32,1], index: 3, kind: input, shape index: {}]
  %s4 = inlined_call_operand.vmem [shape: f32[32,32], index: 4, kind: input, shape index: {}]
  %s5 = inlined_call_operand.vmem [shape: f32[32,1], index: 5, kind: input, shape index: {}]
  %s6 = inlined_call_operand.vmem [shape: f32[4,32], index: 6, kind: input, shape index: {}]
  %s7 = inlined_call_operand.vmem [shape: f32[4,1], index: 7, kind: input, shape index: {}]
  %s8 = inlined_call_operand.hbm [shape: f32[4,256], index: 8, kind: output, shape index: {}]
  %s9 = sld [smem:[#allocation0]]
  $region42: #{_rk4_call.1} parent=0
    _
  %s11 = ssub.s32 1, %s9
  %s12 = scalar_select 0, %s11, %s9
  %13 = sst [smem:[#allocation2]] %s0
  $region1: #{_rk4_call.1} parent=0
    #allocation3 [shape = 'u8[4096]{0}', space=vmem, size = 0x1000, scoped, tag = 'output window, operand 0, single buffered']
    #allocation4 [shape = 's32[1]{0}', space=sflag, size = 0x4, scoped, tag = 'scoped memory for _rk4_call.1']
    %14 = vsyncpa [#allocation4], 0
    // Predicated region
    $region2: #{_rk4_call.1} parent=1 // pred_check
      _
    $region3: #{_rk4_call.1} parent=1 // pred_check_branch
      %16 = sbr.rel (0) target = $region5
    $region4: #{_rk4_call.1} parent=1 // pred_region
      _
    $region5: #{_rk4_call.1} parent=1 // pred_fallthru
      _
    // Predicated region
    $region6: #{_rk4_call.1} parent=1 // pred_check
      _
    $region7: #{_rk4_call.1} parent=1 // pred_check_branch
      %18 = sbr.rel (0) target = $region9
    $region8: #{_rk4_call.1} parent=1 // pred_region
      _
    $region9: #{_rk4_call.1} parent=1 // pred_fallthru
      _
    // Predicated region
    $region10: #{_rk4_call.1} parent=1 // pred_check
      _
    $region11: #{_rk4_call.1} parent=1 // pred_check_branch
      %20 = sbr.rel (0) target = $region13
    $region12: #{_rk4_call.1} parent=1 // pred_region
      _
    $region13: #{_rk4_call.1} parent=1 // pred_fallthru
      _
    // Predicated region
    $region14: #{_rk4_call.1} parent=1 // pred_check
      _
    $region15: #{_rk4_call.1} parent=1 // pred_check_branch
      %22 = sbr.rel (0) target = $region17
    $region16: #{_rk4_call.1} parent=1 // pred_region
      _
    $region17: #{_rk4_call.1} parent=1 // pred_fallthru
      _
    // Predicated region
    $region18: #{_rk4_call.1} parent=1 // pred_check
      _
    $region19: #{_rk4_call.1} parent=1 // pred_check_branch
      %24 = sbr.rel (0) target = $region21
    $region20: #{_rk4_call.1} parent=1 // pred_region
      _
    $region21: #{_rk4_call.1} parent=1 // pred_fallthru
      _
    // Predicated region
    $region22: #{_rk4_call.1} parent=1 // pred_check
      _
    $region23: #{_rk4_call.1} parent=1 // pred_check_branch
      %26 = sbr.rel (0) target = $region25
    $region24: #{_rk4_call.1} parent=1 // pred_region
      _
    $region25: #{_rk4_call.1} parent=1 // pred_fallthru
      _
    // Predicated region
    $region26: #{_rk4_call.1} parent=1 // pred_check
      _
    $region27: #{_rk4_call.1} parent=1 // pred_check_branch
      %28 = sbr.rel (0) target = $region29
    $region28: #{_rk4_call.1} parent=1 // pred_region
      _
    $region29: #{_rk4_call.1} parent=1 // pred_fallthru
      _
    // Predicated region
    $region30: #{_rk4_call.1} parent=1 // pred_check
      _
    $region31: #{_rk4_call.1} parent=1 // pred_check_branch
      %30 = sbr.rel (0) target = $region33
    $region32: #{_rk4_call.1} parent=1 // pred_region
      _
    $region33: #{_rk4_call.1} parent=1 // pred_fallthru
      _
    %v31 = vld [vmem:[%s1] sm:$0xff]
    %v32 = vld [vmem:[%s2] sm:$0xff]
    %v33 = vld [vmem:[%s2 + $0x8] sm:$0xff]
    %v34 = vld [vmem:[%s2 + $0x10] sm:$0xff]
    %v35 = vld [vmem:[%s2 + $0x18] sm:$0xff]
    %v36 = vld [vmem:[%s4] sm:$0xff]
    %v37 = vld [vmem:[%s4 + $0x8] sm:$0xff]
    %v38 = vld [vmem:[%s4 + $0x10] sm:$0xff]
    %v39 = vld [vmem:[%s4 + $0x18] sm:$0xff]
    %v40 = vld [vmem:[%s6] sm:$0xf]
    %v41 = vld [vmem:[%s3] sm:$0xff]
    %v42 = vld [vmem:[%s3 + $0x8] sm:$0xff]
    %v43 = vld [vmem:[%s3 + $0x10] sm:$0xff]
    %v44 = vld [vmem:[%s3 + $0x18] sm:$0xff]
    %v45 = vld [vmem:[%s5] sm:$0xff]
    %v46 = vld [vmem:[%s5 + $0x8] sm:$0xff]
    %v47 = vld [vmem:[%s5 + $0x10] sm:$0xff]
    %v48 = vld [vmem:[%s5 + $0x18] sm:$0xff]
    %v49 = vld [vmem:[%s7] sm:$0xf]
    %s50 = sld [smem:[#allocation2]]
    %v51 = vtanh.pop %v31
    %53 = vset.pattern.permute.xlu0 0
    %54 = vperm.xlu0 %53, %v41
    %v55 = vpop.permute.xlu0 %54
    %58 = vset.pattern.permute.xlu0 0
    %59 = vperm.xlu0 %58, %v42
    %v60 = vpop.permute.xlu0 %59
    %63 = vset.pattern.permute.xlu0 0
    %64 = vperm.xlu0 %63, %v43
    %v65 = vpop.permute.xlu0 %64
    %68 = vset.pattern.permute.xlu0 0
    %69 = vperm.xlu0 %68, %v44
    %v70 = vpop.permute.xlu0 %69
    %v73 = vcombine.high %v51, %v51
    %vm74 = vcmask 31744
    %v76 = vsel %vm74, %v32, 0
    %v79 = vsel %vm74, %v33, 0
    %v82 = vsel %vm74, %v34, 0
    %v85 = vsel %vm74, %v35, 0
    %vm87 = vcmask 1043456
    %v88 = vsel %vm87, %v51, 0
    %v90 = vsel %vm87, %v73, 0
    %92 = vmatprep.subr.mxu0 %v90
    %93 = vmatpush1.msra.mxu0 %v88
    %94 = vmatprep.subr.mxu0 0.0
    %95 = vmatpush1.msra.mxu0 0.0
    %96 = vmatprep.subr.mxu0 0.0
    %97 = vmatpush1.msra.mxu0 0.0
    %98 = vmatprep.subr.mxu0 0.0
    %99 = vmatpush1.msra.mxu0 0.0
    %100 = vmatprep.subr.mxu0 0.0
    %101 = vmatpush1.msra.mxu0 0.0
    %102 = vmatprep.subr.mxu0 0.0
    %103 = vmatpush1.msra.mxu0 0.0
    %104 = vmatprep.subr.mxu0 0.0
    %105 = vmatpush1.msra.mxu0 0.0
    %106 = vmatprep.subr.mxu0 0.0
    %107 = vmatpush1.msra.mxu0 0.0
    %108 = vmatprep.subr.mxu0 0.0
    %109 = vmatpush1.msra.mxu0 0.0
    %110 = vmatprep.subr.mxu0 0.0
    %111 = vmatpush1.msra.mxu0 0.0
    %112 = vmatprep.subr.mxu0 0.0
    %113 = vmatpush1.msra.mxu0 0.0
    %114 = vmatprep.subr.mxu0 0.0
    %115 = vmatpush1.msra.mxu0 0.0
    %116 = vmatprep.subr.mxu0 0.0
    %117 = vmatpush1.msra.mxu0 0.0
    %118 = vmatprep.subr.mxu0 0.0
    %119 = vmatpush1.msra.mxu0 0.0
    %120 = vmatprep.subr.mxu0 0.0
    %121 = vmatpush1.msra.mxu0 0.0
    %122 = vmatprep.subr.mxu0 0.0
    %123 = vmatpush1.msra.mxu0 0.0
    %124 = vmatprep.subr.mxu0 0.0
    %125 = vmatpush1.msra.mxu0 0.0
    %126 = vmatprep.subr.mxu0 0.0
    %127 = vmatpush1.msra.mxu0 0.0
    %128 = vmatprep.subr.mxu0 0.0
    %129 = vmatpush1.msra.mxu0 0.0
    %130 = vmatprep.subr.mxu0 0.0
    %131 = vmatpush1.msra.mxu0 0.0
    %132 = vmatprep.subr.mxu0 0.0
    %133 = vmatpush1.msra.mxu0 0.0
    %134 = vmatprep.subr.mxu0 0.0
    %135 = vmatpush1.msra.mxu0 0.0
    %136 = vmatprep.subr.mxu0 0.0
    %137 = vmatpush1.msra.mxu0 0.0
    %138 = vmatprep.subr.mxu0 0.0
    %139 = vmatpush1.msra.mxu0 0.0
    %140 = vmatprep.subr.mxu0 0.0
    %141 = vmatpush1.msra.mxu0 0.0
    %142 = vmatprep.subr.mxu0 0.0
    %143 = vmatpush1.msra.mxu0 0.0
    %144 = vmatprep.subr.mxu0 0.0
    %145 = vmatpush1.msra.mxu0 0.0
    %146 = vmatprep.subr.mxu0 0.0
    %147 = vmatpush1.msra.mxu0 0.0
    %148 = vmatprep.subr.mxu0 0.0
    %149 = vmatpush1.msra.mxu0 0.0
    %150 = vmatprep.subr.mxu0 0.0
    %151 = vmatpush1.msra.mxu0 0.0
    %152 = vmatprep.subr.mxu0 0.0
    %153 = vmatpush1.msra.mxu0 0.0
    %154 = vmatprep.subr.mxu0 0.0
    %155 = vmatpush1.msra.mxu0 0.0
    %156 = vmatprep.mubr.f32.mxu0 0.0
    %157 = vmatmul.mubr.f32.gmra.mrb[0].mxu0 %v76
    %v158 = vpop.f32.mrb[0].mxu0
    %v159 = vadd.f32 %v55, %v158
    %v160 = vpop.f32.mrb[0].mxu0
    %v161 = vadd.f32 %v55, %v160
    %162 = vmatprep.mubr.f32.mxu0 0.0
    %163 = vmatmul.mubr.f32.gmra.mrb[0].mxu0 %v79
    %v164 = vpop.f32.mrb[0].mxu0
    %v165 = vadd.f32 %v60, %v164
    %v166 = vpop.f32.mrb[0].mxu0
    %v167 = vadd.f32 %v60, %v166
    %168 = vmatprep.mubr.f32.mxu0 0.0
    %169 = vmatmul.mubr.f32.gmra.mrb[0].mxu0 %v82
    %v170 = vpop.f32.mrb[0].mxu0
    %v171 = vadd.f32 %v65, %v170
    %v172 = vpop.f32.mrb[0].mxu0
    %v173 = vadd.f32 %v65, %v172
    %174 = vmatprep.mubr.f32.mxu0 0.0
    %175 = vmatmul.mubr.f32.gmra.mrb[0].mxu0 %v85
    %v176 = vpop.f32.mrb[0].mxu0
    %v177 = vadd.f32 %v70, %v176
    %v178 = vpop.f32.mrb[0].mxu0
    %v179 = vadd.f32 %v70, %v178
    %180 = vdwg.mxu0
    %v181 = vtanh.pop %v159
    %v182 = vtanh.pop %v161
    %v183 = vtanh.pop %v165
    %v184 = vtanh.pop %v167
    %v185 = vtanh.pop %v171
    %v186 = vtanh.pop %v173
    %v187 = vtanh.pop %v177
    %v188 = vtanh.pop %v179
    %190 = vset.pattern.permute.xlu0 0
    %191 = vperm.xlu0 %190, %v45
    %v192 = vpop.permute.xlu0 %191
    %195 = vset.pattern.permute.xlu0 0
    %196 = vperm.xlu0 %195, %v46
    %v197 = vpop.permute.xlu0 %196
    %200 = vset.pattern.permute.xlu0 0
    %201 = vperm.xlu0 %200, %v47
    %v202 = vpop.permute.xlu0 %201
    %205 = vset.pattern.permute.xlu0 0
    %206 = vperm.xlu0 %205, %v48
    %v207 = vpop.permute.xlu0 %206
    %vm209 = vcmask 261120
    %v211 = vsel %vm209, %v36, 0
    %v214 = vsel %vm209, %v37, 0
    %v217 = vsel %vm209, %v38, 0
    %v220 = vsel %vm209, %v39, 0
    %222 = vmatprep.subr.mxu0 %v182
    %223 = vmatpush1.msra.mxu0 %v181
    %224 = vmatprep.subr.mxu0 %v184
    %225 = vmatpush1.msra.mxu0 %v183
    %226 = vmatprep.subr.mxu0 %v186
    %227 = vmatpush1.msra.mxu0 %v185
    %228 = vmatprep.subr.mxu0 %v188
    %229 = vmatpush1.msra.mxu0 %v187
    %230 = vmatprep.subr.mxu0 0.0
    %231 = vmatpush1.msra.mxu0 0.0
    %232 = vmatprep.subr.mxu0 0.0
    %233 = vmatpush1.msra.mxu0 0.0
    %234 = vmatprep.subr.mxu0 0.0
    %235 = vmatpush1.msra.mxu0 0.0
    %236 = vmatprep.subr.mxu0 0.0
    %237 = vmatpush1.msra.mxu0 0.0
    %238 = vmatprep.subr.mxu0 0.0
    %239 = vmatpush1.msra.mxu0 0.0
    %240 = vmatprep.subr.mxu0 0.0
    %241 = vmatpush1.msra.mxu0 0.0
    %242 = vmatprep.subr.mxu0 0.0
    %243 = vmatpush1.msra.mxu0 0.0
    %244 = vmatprep.subr.mxu0 0.0
    %245 = vmatpush1.msra.mxu0 0.0
    %246 = vmatprep.subr.mxu0 0.0
    %247 = vmatpush1.msra.mxu0 0.0
    %248 = vmatprep.subr.mxu0 0.0
    %249 = vmatpush1.msra.mxu0 0.0
    %250 = vmatprep.subr.mxu0 0.0
    %251 = vmatpush1.msra.mxu0 0.0
    %252 = vmatprep.subr.mxu0 0.0
    %253 = vmatpush1.msra.mxu0 0.0
    %254 = vmatprep.subr.mxu0 0.0
    %255 = vmatpush1.msra.mxu0 0.0
    %256 = vmatprep.subr.mxu0 0.0
    %257 = vmatpush1.msra.mxu0 0.0
    %258 = vmatprep.subr.mxu0 0.0
    %259 = vmatpush1.msra.mxu0 0.0
    %260 = vmatprep.subr.mxu0 0.0
    %261 = vmatpush1.msra.mxu0 0.0
    %262 = vmatprep.subr.mxu0 0.0
    %263 = vmatpush1.msra.mxu0 0.0
    %264 = vmatprep.subr.mxu0 0.0
    %265 = vmatpush1.msra.mxu0 0.0
    %266 = vmatprep.subr.mxu0 0.0
    %267 = vmatpush1.msra.mxu0 0.0
    %268 = vmatprep.subr.mxu0 0.0
    %269 = vmatpush1.msra.mxu0 0.0
    %270 = vmatprep.subr.mxu0 0.0
    %271 = vmatpush1.msra.mxu0 0.0
    %272 = vmatprep.subr.mxu0 0.0
    %273 = vmatpush1.msra.mxu0 0.0
    %274 = vmatprep.subr.mxu0 0.0
    %275 = vmatpush1.msra.mxu0 0.0
    %276 = vmatprep.subr.mxu0 0.0
    %277 = vmatpush1.msra.mxu0 0.0
    %278 = vmatprep.subr.mxu0 0.0
    %279 = vmatpush1.msra.mxu0 0.0
    %280 = vmatprep.subr.mxu0 0.0
    %281 = vmatpush1.msra.mxu0 0.0
    %282 = vmatprep.subr.mxu0 0.0
    %283 = vmatpush1.msra.mxu0 0.0
    %284 = vmatprep.subr.mxu0 0.0
    %285 = vmatpush1.msra.mxu0 0.0
    %286 = vmatprep.mubr.f32.mxu0 0.0
    %287 = vmatmul.mubr.f32.gmra.mrb[0].mxu0 %v211
    %v288 = vpop.f32.mrb[0].mxu0
    %v289 = vadd.f32 %v192, %v288
    %v290 = vpop.f32.mrb[0].mxu0
    %v291 = vadd.f32 %v192, %v290
    %292 = vmatprep.mubr.f32.mxu0 0.0
    %293 = vmatmul.mubr.f32.gmra.mrb[0].mxu0 %v214
    %v294 = vpop.f32.mrb[0].mxu0
    %v295 = vadd.f32 %v197, %v294
    %v296 = vpop.f32.mrb[0].mxu0
    %v297 = vadd.f32 %v197, %v296
    %298 = vmatprep.mubr.f32.mxu0 0.0
    %299 = vmatmul.mubr.f32.gmra.mrb[0].mxu0 %v217
    %v300 = vpop.f32.mrb[0].mxu0
    %v301 = vadd.f32 %v202, %v300
    %v302 = vpop.f32.mrb[0].mxu0
    %v303 = vadd.f32 %v202, %v302
    %304 = vmatprep.mubr.f32.mxu0 0.0
    %305 = vmatmul.mubr.f32.gmra.mrb[0].mxu0 %v220
    %v306 = vpop.f32.mrb[0].mxu0
    %v307 = vadd.f32 %v207, %v306
    %v308 = vpop.f32.mrb[0].mxu0
    %v309 = vadd.f32 %v207, %v308
    %310 = vdwg.mxu0
    %v311 = vtanh.pop %v289
    %v312 = vtanh.pop %v291
    %v313 = vtanh.pop %v295
    %v314 = vtanh.pop %v297
    %v315 = vtanh.pop %v301
    %v316 = vtanh.pop %v303
    %v317 = vtanh.pop %v307
    %v318 = vtanh.pop %v309
    %320 = vset.pattern.permute.xlu0 0
    %321 = vperm.xlu0 %320, %v49
    %v322 = vpop.permute.xlu0 %321
    %v325 = vsel %vm209, %v40, 0
    %327 = vmatprep.subr.mxu0 %v312
    %328 = vmatpush1.msra.mxu0 %v311
    %329 = vmatprep.subr.mxu0 %v314
    %330 = vmatpush1.msra.mxu0 %v313
    %331 = vmatprep.subr.mxu0 %v316
    %332 = vmatpush1.msra.mxu0 %v315
    %333 = vmatprep.subr.mxu0 %v318
    %334 = vmatpush1.msra.mxu0 %v317
    %335 = vmatprep.subr.mxu0 0.0
    %336 = vmatpush1.msra.mxu0 0.0
    %337 = vmatprep.subr.mxu0 0.0
    %338 = vmatpush1.msra.mxu0 0.0
    %339 = vmatprep.subr.mxu0 0.0
    %340 = vmatpush1.msra.mxu0 0.0
    %341 = vmatprep.subr.mxu0 0.0
    %342 = vmatpush1.msra.mxu0 0.0
    %343 = vmatprep.subr.mxu0 0.0
    %344 = vmatpush1.msra.mxu0 0.0
    %345 = vmatprep.subr.mxu0 0.0
    %346 = vmatpush1.msra.mxu0 0.0
    %347 = vmatprep.subr.mxu0 0.0
    %348 = vmatpush1.msra.mxu0 0.0
    %349 = vmatprep.subr.mxu0 0.0
    %350 = vmatpush1.msra.mxu0 0.0
    %351 = vmatprep.subr.mxu0 0.0
    %352 = vmatpush1.msra.mxu0 0.0
    %353 = vmatprep.subr.mxu0 0.0
    %354 = vmatpush1.msra.mxu0 0.0
    %355 = vmatprep.subr.mxu0 0.0
    %356 = vmatpush1.msra.mxu0 0.0
    %357 = vmatprep.subr.mxu0 0.0
    %358 = vmatpush1.msra.mxu0 0.0
    %359 = vmatprep.subr.mxu0 0.0
    %360 = vmatpush1.msra.mxu0 0.0
    %361 = vmatprep.subr.mxu0 0.0
    %362 = vmatpush1.msra.mxu0 0.0
    %363 = vmatprep.subr.mxu0 0.0
    %364 = vmatpush1.msra.mxu0 0.0
    %365 = vmatprep.subr.mxu0 0.0
    %366 = vmatpush1.msra.mxu0 0.0
    %367 = vmatprep.subr.mxu0 0.0
    %368 = vmatpush1.msra.mxu0 0.0
    %369 = vmatprep.subr.mxu0 0.0
    %370 = vmatpush1.msra.mxu0 0.0
    %371 = vmatprep.subr.mxu0 0.0
    %372 = vmatpush1.msra.mxu0 0.0
    %373 = vmatprep.subr.mxu0 0.0
    %374 = vmatpush1.msra.mxu0 0.0
    %375 = vmatprep.subr.mxu0 0.0
    %376 = vmatpush1.msra.mxu0 0.0
    %377 = vmatprep.subr.mxu0 0.0
    %378 = vmatpush1.msra.mxu0 0.0
    %379 = vmatprep.subr.mxu0 0.0
    %380 = vmatpush1.msra.mxu0 0.0
    %381 = vmatprep.subr.mxu0 0.0
    %382 = vmatpush1.msra.mxu0 0.0
    %383 = vmatprep.subr.mxu0 0.0
    %384 = vmatpush1.msra.mxu0 0.0
    %385 = vmatprep.subr.mxu0 0.0
    %386 = vmatpush1.msra.mxu0 0.0
    %387 = vmatprep.subr.mxu0 0.0
    %388 = vmatpush1.msra.mxu0 0.0
    %389 = vmatprep.subr.mxu0 0.0
    %390 = vmatpush1.msra.mxu0 0.0
    %391 = vmatprep.mubr.f32.mxu0 0.0
    %392 = vmatmul.mubr.f32.gmra.mrb[0].mxu0 %v325
    %v393 = vpop.f32.mrb[0].mxu0
    %v394 = vadd.f32 %v322, %v393
    %v395 = vpop.f32.mrb[0].mxu0
    %v396 = vadd.f32 %v322, %v395
    %397 = vdwg.mxu0
    %v398 = vmul.f32 %v394, 0.5
    %v399 = vmul.f32 %v396, 0.5
    %v402 = vcombine.low %v398, %v399
    %v404 = vadd.f32 %v31, %v402
    %v405 = vtanh.pop %v404
    %v407 = vcombine.high %v405, %v405
    %v408 = vsel %vm87, %v405, 0
    %v410 = vsel %vm87, %v407, 0
    %412 = vmatprep.subr.mxu0 %v410
    %413 = vmatpush1.msra.mxu0 %v408
    %414 = vmatprep.subr.mxu0 0.0
    %415 = vmatpush1.msra.mxu0 0.0
    %416 = vmatprep.subr.mxu0 0.0
    %417 = vmatpush1.msra.mxu0 0.0
    %418 = vmatprep.subr.mxu0 0.0
    %419 = vmatpush1.msra.mxu0 0.0
    %420 = vmatprep.subr.mxu0 0.0
    %421 = vmatpush1.msra.mxu0 0.0
    %422 = vmatprep.subr.mxu0 0.0
    %423 = vmatpush1.msra.mxu0 0.0
    %424 = vmatprep.subr.mxu0 0.0
    %425 = vmatpush1.msra.mxu0 0.0
    %426 = vmatprep.subr.mxu0 0.0
    %427 = vmatpush1.msra.mxu0 0.0
    %428 = vmatprep.subr.mxu0 0.0
    %429 = vmatpush1.msra.mxu0 0.0
    %430 = vmatprep.subr.mxu0 0.0
    %431 = vmatpush1.msra.mxu0 0.0
    %432 = vmatprep.subr.mxu0 0.0
    %433 = vmatpush1.msra.mxu0 0.0
    %434 = vmatprep.subr.mxu0 0.0
    %435 = vmatpush1.msra.mxu0 0.0
    %436 = vmatprep.subr.mxu0 0.0
    %437 = vmatpush1.msra.mxu0 0.0
    %438 = vmatprep.subr.mxu0 0.0
    %439 = vmatpush1.msra.mxu0 0.0
    %440 = vmatprep.subr.mxu0 0.0
    %441 = vmatpush1.msra.mxu0 0.0
    %442 = vmatprep.subr.mxu0 0.0
    %443 = vmatpush1.msra.mxu0 0.0
    %444 = vmatprep.subr.mxu0 0.0
    %445 = vmatpush1.msra.mxu0 0.0
    %446 = vmatprep.subr.mxu0 0.0
    %447 = vmatpush1.msra.mxu0 0.0
    %448 = vmatprep.subr.mxu0 0.0
    %449 = vmatpush1.msra.mxu0 0.0
    %450 = vmatprep.subr.mxu0 0.0
    %451 = vmatpush1.msra.mxu0 0.0
    %452 = vmatprep.subr.mxu0 0.0
    %453 = vmatpush1.msra.mxu0 0.0
    %454 = vmatprep.subr.mxu0 0.0
    %455 = vmatpush1.msra.mxu0 0.0
    %456 = vmatprep.subr.mxu0 0.0
    %457 = vmatpush1.msra.mxu0 0.0
    %458 = vmatprep.subr.mxu0 0.0
    %459 = vmatpush1.msra.mxu0 0.0
    %460 = vmatprep.subr.mxu0 0.0
    %461 = vmatpush1.msra.mxu0 0.0
    %462 = vmatprep.subr.mxu0 0.0
    %463 = vmatpush1.msra.mxu0 0.0
    %464 = vmatprep.subr.mxu0 0.0
    %465 = vmatpush1.msra.mxu0 0.0
    %466 = vmatprep.subr.mxu0 0.0
    %467 = vmatpush1.msra.mxu0 0.0
    %468 = vmatprep.subr.mxu0 0.0
    %469 = vmatpush1.msra.mxu0 0.0
    %470 = vmatprep.subr.mxu0 0.0
    %471 = vmatpush1.msra.mxu0 0.0
    %472 = vmatprep.subr.mxu0 0.0
    %473 = vmatpush1.msra.mxu0 0.0
    %474 = vmatprep.subr.mxu0 0.0
    %475 = vmatpush1.msra.mxu0 0.0
    %476 = vmatprep.mubr.f32.mxu0 0.0
    %477 = vmatmul.mubr.f32.gmra.mrb[0].mxu0 %v76
    %v478 = vpop.f32.mrb[0].mxu0
    %v479 = vadd.f32 %v55, %v478
    %v480 = vpop.f32.mrb[0].mxu0
    %v481 = vadd.f32 %v55, %v480
    %482 = vmatprep.mubr.f32.mxu0 0.0
    %483 = vmatmul.mubr.f32.gmra.mrb[0].mxu0 %v79
    %v484 = vpop.f32.mrb[0].mxu0
    %v485 = vadd.f32 %v60, %v484
    %v486 = vpop.f32.mrb[0].mxu0
    %v487 = vadd.f32 %v60, %v486
    %488 = vmatprep.mubr.f32.mxu0 0.0
    %489 = vmatmul.mubr.f32.gmra.mrb[0].mxu0 %v82
    %v490 = vpop.f32.mrb[0].mxu0
    %v491 = vadd.f32 %v65, %v490
    %v492 = vpop.f32.mrb[0].mxu0
    %v493 = vadd.f32 %v65, %v492
    %494 = vmatprep.mubr.f32.mxu0 0.0
    %495 = vmatmul.mubr.f32.gmra.mrb[0].mxu0 %v85
    %v496 = vpop.f32.mrb[0].mxu0
    %v497 = vadd.f32 %v70, %v496
    %v498 = vpop.f32.mrb[0].mxu0
    %v499 = vadd.f32 %v70, %v498
    %500 = vdwg.mxu0
    %v501 = vtanh.pop %v479
    %v502 = vtanh.pop %v481
    %v503 = vtanh.pop %v485
    %v504 = vtanh.pop %v487
    %v505 = vtanh.pop %v491
    %v506 = vtanh.pop %v493
    %v507 = vtanh.pop %v497
    %v508 = vtanh.pop %v499
    %509 = vmatprep.subr.mxu0 %v502
    %510 = vmatpush1.msra.mxu0 %v501
    %511 = vmatprep.subr.mxu0 %v504
    %512 = vmatpush1.msra.mxu0 %v503
    %513 = vmatprep.subr.mxu0 %v506
    %514 = vmatpush1.msra.mxu0 %v505
    %515 = vmatprep.subr.mxu0 %v508
    %516 = vmatpush1.msra.mxu0 %v507
    %517 = vmatprep.subr.mxu0 0.0
    %518 = vmatpush1.msra.mxu0 0.0
    %519 = vmatprep.subr.mxu0 0.0
    %520 = vmatpush1.msra.mxu0 0.0
    %521 = vmatprep.subr.mxu0 0.0
    %522 = vmatpush1.msra.mxu0 0.0
    %523 = vmatprep.subr.mxu0 0.0
    %524 = vmatpush1.msra.mxu0 0.0
    %525 = vmatprep.subr.mxu0 0.0
    %526 = vmatpush1.msra.mxu0 0.0
    %527 = vmatprep.subr.mxu0 0.0
    %528 = vmatpush1.msra.mxu0 0.0
    %529 = vmatprep.subr.mxu0 0.0
    %530 = vmatpush1.msra.mxu0 0.0
    %531 = vmatprep.subr.mxu0 0.0
    %532 = vmatpush1.msra.mxu0 0.0
    %533 = vmatprep.subr.mxu0 0.0
    %534 = vmatpush1.msra.mxu0 0.0
    %535 = vmatprep.subr.mxu0 0.0
    %536 = vmatpush1.msra.mxu0 0.0
    %537 = vmatprep.subr.mxu0 0.0
    %538 = vmatpush1.msra.mxu0 0.0
    %539 = vmatprep.subr.mxu0 0.0
    %540 = vmatpush1.msra.mxu0 0.0
    %541 = vmatprep.subr.mxu0 0.0
    %542 = vmatpush1.msra.mxu0 0.0
    %543 = vmatprep.subr.mxu0 0.0
    %544 = vmatpush1.msra.mxu0 0.0
    %545 = vmatprep.subr.mxu0 0.0
    %546 = vmatpush1.msra.mxu0 0.0
    %547 = vmatprep.subr.mxu0 0.0
    %548 = vmatpush1.msra.mxu0 0.0
    %549 = vmatprep.subr.mxu0 0.0
    %550 = vmatpush1.msra.mxu0 0.0
    %551 = vmatprep.subr.mxu0 0.0
    %552 = vmatpush1.msra.mxu0 0.0
    %553 = vmatprep.subr.mxu0 0.0
    %554 = vmatpush1.msra.mxu0 0.0
    %555 = vmatprep.subr.mxu0 0.0
    %556 = vmatpush1.msra.mxu0 0.0
    %557 = vmatprep.subr.mxu0 0.0
    %558 = vmatpush1.msra.mxu0 0.0
    %559 = vmatprep.subr.mxu0 0.0
    %560 = vmatpush1.msra.mxu0 0.0
    %561 = vmatprep.subr.mxu0 0.0
    %562 = vmatpush1.msra.mxu0 0.0
    %563 = vmatprep.subr.mxu0 0.0
    %564 = vmatpush1.msra.mxu0 0.0
    %565 = vmatprep.subr.mxu0 0.0
    %566 = vmatpush1.msra.mxu0 0.0
    %567 = vmatprep.subr.mxu0 0.0
    %568 = vmatpush1.msra.mxu0 0.0
    %569 = vmatprep.subr.mxu0 0.0
    %570 = vmatpush1.msra.mxu0 0.0
    %571 = vmatprep.subr.mxu0 0.0
    %572 = vmatpush1.msra.mxu0 0.0
    %573 = vmatprep.mubr.f32.mxu0 0.0
    %574 = vmatmul.mubr.f32.gmra.mrb[0].mxu0 %v211
    %v575 = vpop.f32.mrb[0].mxu0
    %v576 = vadd.f32 %v192, %v575
    %v577 = vpop.f32.mrb[0].mxu0
    %v578 = vadd.f32 %v192, %v577
    %579 = vmatprep.mubr.f32.mxu0 0.0
    %580 = vmatmul.mubr.f32.gmra.mrb[0].mxu0 %v214
    %v581 = vpop.f32.mrb[0].mxu0
    %v582 = vadd.f32 %v197, %v581
    %v583 = vpop.f32.mrb[0].mxu0
    %v584 = vadd.f32 %v197, %v583
    %585 = vmatprep.mubr.f32.mxu0 0.0
    %586 = vmatmul.mubr.f32.gmra.mrb[0].mxu0 %v217
    %v587 = vpop.f32.mrb[0].mxu0
    %v588 = vadd.f32 %v202, %v587
    %v589 = vpop.f32.mrb[0].mxu0
    %v590 = vadd.f32 %v202, %v589
    %591 = vmatprep.mubr.f32.mxu0 0.0
    %592 = vmatmul.mubr.f32.gmra.mrb[0].mxu0 %v220
    %v593 = vpop.f32.mrb[0].mxu0
    %v594 = vadd.f32 %v207, %v593
    %v595 = vpop.f32.mrb[0].mxu0
    %v596 = vadd.f32 %v207, %v595
    %597 = vdwg.mxu0
    %v598 = vtanh.pop %v576
    %v599 = vtanh.pop %v578
    %v600 = vtanh.pop %v582
    %v601 = vtanh.pop %v584
    %v602 = vtanh.pop %v588
    %v603 = vtanh.pop %v590
    %v604 = vtanh.pop %v594
    %v605 = vtanh.pop %v596
    %606 = vmatprep.subr.mxu0 %v599
    %607 = vmatpush1.msra.mxu0 %v598
    %608 = vmatprep.subr.mxu0 %v601
    %609 = vmatpush1.msra.mxu0 %v600
    %610 = vmatprep.subr.mxu0 %v603
    %611 = vmatpush1.msra.mxu0 %v602
    %612 = vmatprep.subr.mxu0 %v605
    %613 = vmatpush1.msra.mxu0 %v604
    %614 = vmatprep.subr.mxu0 0.0
    %615 = vmatpush1.msra.mxu0 0.0
    %616 = vmatprep.subr.mxu0 0.0
    %617 = vmatpush1.msra.mxu0 0.0
    %618 = vmatprep.subr.mxu0 0.0
    %619 = vmatpush1.msra.mxu0 0.0
    %620 = vmatprep.subr.mxu0 0.0
    %621 = vmatpush1.msra.mxu0 0.0
    %622 = vmatprep.subr.mxu0 0.0
    %623 = vmatpush1.msra.mxu0 0.0
    %624 = vmatprep.subr.mxu0 0.0
    %625 = vmatpush1.msra.mxu0 0.0
    %626 = vmatprep.subr.mxu0 0.0
    %627 = vmatpush1.msra.mxu0 0.0
    %628 = vmatprep.subr.mxu0 0.0
    %629 = vmatpush1.msra.mxu0 0.0
    %630 = vmatprep.subr.mxu0 0.0
    %631 = vmatpush1.msra.mxu0 0.0
    %632 = vmatprep.subr.mxu0 0.0
    %633 = vmatpush1.msra.mxu0 0.0
    %634 = vmatprep.subr.mxu0 0.0
    %635 = vmatpush1.msra.mxu0 0.0
    %636 = vmatprep.subr.mxu0 0.0
    %637 = vmatpush1.msra.mxu0 0.0
    %638 = vmatprep.subr.mxu0 0.0
    %639 = vmatpush1.msra.mxu0 0.0
    %640 = vmatprep.subr.mxu0 0.0
    %641 = vmatpush1.msra.mxu0 0.0
    %642 = vmatprep.subr.mxu0 0.0
    %643 = vmatpush1.msra.mxu0 0.0
    %644 = vmatprep.subr.mxu0 0.0
    %645 = vmatpush1.msra.mxu0 0.0
    %646 = vmatprep.subr.mxu0 0.0
    %647 = vmatpush1.msra.mxu0 0.0
    %648 = vmatprep.subr.mxu0 0.0
    %649 = vmatpush1.msra.mxu0 0.0
    %650 = vmatprep.subr.mxu0 0.0
    %651 = vmatpush1.msra.mxu0 0.0
    %652 = vmatprep.subr.mxu0 0.0
    %653 = vmatpush1.msra.mxu0 0.0
    %654 = vmatprep.subr.mxu0 0.0
    %655 = vmatpush1.msra.mxu0 0.0
    %656 = vmatprep.subr.mxu0 0.0
    %657 = vmatpush1.msra.mxu0 0.0
    %658 = vmatprep.subr.mxu0 0.0
    %659 = vmatpush1.msra.mxu0 0.0
    %660 = vmatprep.subr.mxu0 0.0
    %661 = vmatpush1.msra.mxu0 0.0
    %662 = vmatprep.subr.mxu0 0.0
    %663 = vmatpush1.msra.mxu0 0.0
    %664 = vmatprep.subr.mxu0 0.0
    %665 = vmatpush1.msra.mxu0 0.0
    %666 = vmatprep.subr.mxu0 0.0
    %667 = vmatpush1.msra.mxu0 0.0
    %668 = vmatprep.subr.mxu0 0.0
    %669 = vmatpush1.msra.mxu0 0.0
    %670 = vmatprep.mubr.f32.mxu0 0.0
    %671 = vmatmul.mubr.f32.gmra.mrb[0].mxu0 %v325
    %v672 = vpop.f32.mrb[0].mxu0
    %v673 = vadd.f32 %v322, %v672
    %v674 = vpop.f32.mrb[0].mxu0
    %v675 = vadd.f32 %v322, %v674
    %676 = vdwg.mxu0
    %v677 = vmul.f32 %v673, 0.5
    %v678 = vmul.f32 %v675, 0.5
    %v681 = vcombine.low %v677, %v678
    %v683 = vadd.f32 %v31, %v681
    %v684 = vtanh.pop %v683
    %v686 = vcombine.high %v684, %v684
    %v687 = vsel %vm87, %v684, 0
    %v689 = vsel %vm87, %v686, 0
    %691 = vmatprep.subr.mxu0 %v689
    %692 = vmatpush1.msra.mxu0 %v687
    %693 = vmatprep.subr.mxu0 0.0
    %694 = vmatpush1.msra.mxu0 0.0
    %695 = vmatprep.subr.mxu0 0.0
    %696 = vmatpush1.msra.mxu0 0.0
    %697 = vmatprep.subr.mxu0 0.0
    %698 = vmatpush1.msra.mxu0 0.0
    %699 = vmatprep.subr.mxu0 0.0
    %700 = vmatpush1.msra.mxu0 0.0
    %701 = vmatprep.subr.mxu0 0.0
    %702 = vmatpush1.msra.mxu0 0.0
    %703 = vmatprep.subr.mxu0 0.0
    %704 = vmatpush1.msra.mxu0 0.0
    %705 = vmatprep.subr.mxu0 0.0
    %706 = vmatpush1.msra.mxu0 0.0
    %707 = vmatprep.subr.mxu0 0.0
    %708 = vmatpush1.msra.mxu0 0.0
    %709 = vmatprep.subr.mxu0 0.0
    %710 = vmatpush1.msra.mxu0 0.0
    %711 = vmatprep.subr.mxu0 0.0
    %712 = vmatpush1.msra.mxu0 0.0
    %713 = vmatprep.subr.mxu0 0.0
    %714 = vmatpush1.msra.mxu0 0.0
    %715 = vmatprep.subr.mxu0 0.0
    %716 = vmatpush1.msra.mxu0 0.0
    %717 = vmatprep.subr.mxu0 0.0
    %718 = vmatpush1.msra.mxu0 0.0
    %719 = vmatprep.subr.mxu0 0.0
    %720 = vmatpush1.msra.mxu0 0.0
    %721 = vmatprep.subr.mxu0 0.0
    %722 = vmatpush1.msra.mxu0 0.0
    %723 = vmatprep.subr.mxu0 0.0
    %724 = vmatpush1.msra.mxu0 0.0
    %725 = vmatprep.subr.mxu0 0.0
    %726 = vmatpush1.msra.mxu0 0.0
    %727 = vmatprep.subr.mxu0 0.0
    %728 = vmatpush1.msra.mxu0 0.0
    %729 = vmatprep.subr.mxu0 0.0
    %730 = vmatpush1.msra.mxu0 0.0
    %731 = vmatprep.subr.mxu0 0.0
    %732 = vmatpush1.msra.mxu0 0.0
    %733 = vmatprep.subr.mxu0 0.0
    %734 = vmatpush1.msra.mxu0 0.0
    %735 = vmatprep.subr.mxu0 0.0
    %736 = vmatpush1.msra.mxu0 0.0
    %737 = vmatprep.subr.mxu0 0.0
    %738 = vmatpush1.msra.mxu0 0.0
    %739 = vmatprep.subr.mxu0 0.0
    %740 = vmatpush1.msra.mxu0 0.0
    %741 = vmatprep.subr.mxu0 0.0
    %742 = vmatpush1.msra.mxu0 0.0
    %743 = vmatprep.subr.mxu0 0.0
    %744 = vmatpush1.msra.mxu0 0.0
    %745 = vmatprep.subr.mxu0 0.0
    %746 = vmatpush1.msra.mxu0 0.0
    %747 = vmatprep.subr.mxu0 0.0
    %748 = vmatpush1.msra.mxu0 0.0
    %749 = vmatprep.subr.mxu0 0.0
    %750 = vmatpush1.msra.mxu0 0.0
    %751 = vmatprep.subr.mxu0 0.0
    %752 = vmatpush1.msra.mxu0 0.0
    %753 = vmatprep.subr.mxu0 0.0
    %754 = vmatpush1.msra.mxu0 0.0
    %755 = vmatprep.mubr.f32.mxu0 0.0
    %756 = vmatmul.mubr.f32.gmra.mrb[0].mxu0 %v76
    %v757 = vpop.f32.mrb[0].mxu0
    %v758 = vadd.f32 %v55, %v757
    %v759 = vpop.f32.mrb[0].mxu0
    %v760 = vadd.f32 %v55, %v759
    %761 = vmatprep.mubr.f32.mxu0 0.0
    %762 = vmatmul.mubr.f32.gmra.mrb[0].mxu0 %v79
    %v763 = vpop.f32.mrb[0].mxu0
    %v764 = vadd.f32 %v60, %v763
    %v765 = vpop.f32.mrb[0].mxu0
    %v766 = vadd.f32 %v60, %v765
    %767 = vmatprep.mubr.f32.mxu0 0.0
    %768 = vmatmul.mubr.f32.gmra.mrb[0].mxu0 %v82
    %v769 = vpop.f32.mrb[0].mxu0
    %v770 = vadd.f32 %v65, %v769
    %v771 = vpop.f32.mrb[0].mxu0
    %v772 = vadd.f32 %v65, %v771
    %773 = vmatprep.mubr.f32.mxu0 0.0
    %774 = vmatmul.mubr.f32.gmra.mrb[0].mxu0 %v85
    %v775 = vpop.f32.mrb[0].mxu0
    %v776 = vadd.f32 %v70, %v775
    %v777 = vpop.f32.mrb[0].mxu0
    %v778 = vadd.f32 %v70, %v777
    %779 = vdwg.mxu0
    %v780 = vtanh.pop %v758
    %v781 = vtanh.pop %v760
    %v782 = vtanh.pop %v764
    %v783 = vtanh.pop %v766
    %v784 = vtanh.pop %v770
    %v785 = vtanh.pop %v772
    %v786 = vtanh.pop %v776
    %v787 = vtanh.pop %v778
    %788 = vmatprep.subr.mxu0 %v781
    %789 = vmatpush1.msra.mxu0 %v780
    %790 = vmatprep.subr.mxu0 %v783
    %791 = vmatpush1.msra.mxu0 %v782
    %792 = vmatprep.subr.mxu0 %v785
    %793 = vmatpush1.msra.mxu0 %v784
    %794 = vmatprep.subr.mxu0 %v787
    %795 = vmatpush1.msra.mxu0 %v786
    %796 = vmatprep.subr.mxu0 0.0
    %797 = vmatpush1.msra.mxu0 0.0
    %798 = vmatprep.subr.mxu0 0.0
    %799 = vmatpush1.msra.mxu0 0.0
    %800 = vmatprep.subr.mxu0 0.0
    %801 = vmatpush1.msra.mxu0 0.0
    %802 = vmatprep.subr.mxu0 0.0
    %803 = vmatpush1.msra.mxu0 0.0
    %804 = vmatprep.subr.mxu0 0.0
    %805 = vmatpush1.msra.mxu0 0.0
    %806 = vmatprep.subr.mxu0 0.0
    %807 = vmatpush1.msra.mxu0 0.0
    %808 = vmatprep.subr.mxu0 0.0
    %809 = vmatpush1.msra.mxu0 0.0
    %810 = vmatprep.subr.mxu0 0.0
    %811 = vmatpush1.msra.mxu0 0.0
    %812 = vmatprep.subr.mxu0 0.0
    %813 = vmatpush1.msra.mxu0 0.0
    %814 = vmatprep.subr.mxu0 0.0
    %815 = vmatpush1.msra.mxu0 0.0
    %816 = vmatprep.subr.mxu0 0.0
    %817 = vmatpush1.msra.mxu0 0.0
    %818 = vmatprep.subr.mxu0 0.0
    %819 = vmatpush1.msra.mxu0 0.0
    %820 = vmatprep.subr.mxu0 0.0
    %821 = vmatpush1.msra.mxu0 0.0
    %822 = vmatprep.subr.mxu0 0.0
    %823 = vmatpush1.msra.mxu0 0.0
    %824 = vmatprep.subr.mxu0 0.0
    %825 = vmatpush1.msra.mxu0 0.0
    %826 = vmatprep.subr.mxu0 0.0
    %827 = vmatpush1.msra.mxu0 0.0
    %828 = vmatprep.subr.mxu0 0.0
    %829 = vmatpush1.msra.mxu0 0.0
    %830 = vmatprep.subr.mxu0 0.0
    %831 = vmatpush1.msra.mxu0 0.0
    %832 = vmatprep.subr.mxu0 0.0
    %833 = vmatpush1.msra.mxu0 0.0
    %834 = vmatprep.subr.mxu0 0.0
    %835 = vmatpush1.msra.mxu0 0.0
    %836 = vmatprep.subr.mxu0 0.0
    %837 = vmatpush1.msra.mxu0 0.0
    %838 = vmatprep.subr.mxu0 0.0
    %839 = vmatpush1.msra.mxu0 0.0
    %840 = vmatprep.subr.mxu0 0.0
    %841 = vmatpush1.msra.mxu0 0.0
    %842 = vmatprep.subr.mxu0 0.0
    %843 = vmatpush1.msra.mxu0 0.0
    %844 = vmatprep.subr.mxu0 0.0
    %845 = vmatpush1.msra.mxu0 0.0
    %846 = vmatprep.subr.mxu0 0.0
    %847 = vmatpush1.msra.mxu0 0.0
    %848 = vmatprep.subr.mxu0 0.0
    %849 = vmatpush1.msra.mxu0 0.0
    %850 = vmatprep.subr.mxu0 0.0
    %851 = vmatpush1.msra.mxu0 0.0
    %852 = vmatprep.mubr.f32.mxu0 0.0
    %853 = vmatmul.mubr.f32.gmra.mrb[0].mxu0 %v211
    %v854 = vpop.f32.mrb[0].mxu0
    %v855 = vadd.f32 %v192, %v854
    %v856 = vpop.f32.mrb[0].mxu0
    %v857 = vadd.f32 %v192, %v856
    %858 = vmatprep.mubr.f32.mxu0 0.0
    %859 = vmatmul.mubr.f32.gmra.mrb[0].mxu0 %v214
    %v860 = vpop.f32.mrb[0].mxu0
    %v861 = vadd.f32 %v197, %v860
    %v862 = vpop.f32.mrb[0].mxu0
    %v863 = vadd.f32 %v197, %v862
    %864 = vmatprep.mubr.f32.mxu0 0.0
    %865 = vmatmul.mubr.f32.gmra.mrb[0].mxu0 %v217
    %v866 = vpop.f32.mrb[0].mxu0
    %v867 = vadd.f32 %v202, %v866
    %v868 = vpop.f32.mrb[0].mxu0
    %v869 = vadd.f32 %v202, %v868
    %870 = vmatprep.mubr.f32.mxu0 0.0
    %871 = vmatmul.mubr.f32.gmra.mrb[0].mxu0 %v220
    %v872 = vpop.f32.mrb[0].mxu0
    %v873 = vadd.f32 %v207, %v872
    %v874 = vpop.f32.mrb[0].mxu0
    %v875 = vadd.f32 %v207, %v874
    %876 = vdwg.mxu0
    %v877 = vtanh.pop %v855
    %v878 = vtanh.pop %v857
    %v879 = vtanh.pop %v861
    %v880 = vtanh.pop %v863
    %v881 = vtanh.pop %v867
    %v882 = vtanh.pop %v869
    %v883 = vtanh.pop %v873
    %v884 = vtanh.pop %v875
    %885 = vmatprep.subr.mxu0 %v878
    %886 = vmatpush1.msra.mxu0 %v877
    %887 = vmatprep.subr.mxu0 %v880
    %888 = vmatpush1.msra.mxu0 %v879
    %889 = vmatprep.subr.mxu0 %v882
    %890 = vmatpush1.msra.mxu0 %v881
    %891 = vmatprep.subr.mxu0 %v884
    %892 = vmatpush1.msra.mxu0 %v883
    %893 = vmatprep.subr.mxu0 0.0
    %894 = vmatpush1.msra.mxu0 0.0
    %895 = vmatprep.subr.mxu0 0.0
    %896 = vmatpush1.msra.mxu0 0.0
    %897 = vmatprep.subr.mxu0 0.0
    %898 = vmatpush1.msra.mxu0 0.0
    %899 = vmatprep.subr.mxu0 0.0
    %900 = vmatpush1.msra.mxu0 0.0
    %901 = vmatprep.subr.mxu0 0.0
    %902 = vmatpush1.msra.mxu0 0.0
    %903 = vmatprep.subr.mxu0 0.0
    %904 = vmatpush1.msra.mxu0 0.0
    %905 = vmatprep.subr.mxu0 0.0
    %906 = vmatpush1.msra.mxu0 0.0
    %907 = vmatprep.subr.mxu0 0.0
    %908 = vmatpush1.msra.mxu0 0.0
    %909 = vmatprep.subr.mxu0 0.0
    %910 = vmatpush1.msra.mxu0 0.0
    %911 = vmatprep.subr.mxu0 0.0
    %912 = vmatpush1.msra.mxu0 0.0
    %913 = vmatprep.subr.mxu0 0.0
    %914 = vmatpush1.msra.mxu0 0.0
    %915 = vmatprep.subr.mxu0 0.0
    %916 = vmatpush1.msra.mxu0 0.0
    %917 = vmatprep.subr.mxu0 0.0
    %918 = vmatpush1.msra.mxu0 0.0
    %919 = vmatprep.subr.mxu0 0.0
    %920 = vmatpush1.msra.mxu0 0.0
    %921 = vmatprep.subr.mxu0 0.0
    %922 = vmatpush1.msra.mxu0 0.0
    %923 = vmatprep.subr.mxu0 0.0
    %924 = vmatpush1.msra.mxu0 0.0
    %925 = vmatprep.subr.mxu0 0.0
    %926 = vmatpush1.msra.mxu0 0.0
    %927 = vmatprep.subr.mxu0 0.0
    %928 = vmatpush1.msra.mxu0 0.0
    %929 = vmatprep.subr.mxu0 0.0
    %930 = vmatpush1.msra.mxu0 0.0
    %931 = vmatprep.subr.mxu0 0.0
    %932 = vmatpush1.msra.mxu0 0.0
    %933 = vmatprep.subr.mxu0 0.0
    %934 = vmatpush1.msra.mxu0 0.0
    %935 = vmatprep.subr.mxu0 0.0
    %936 = vmatpush1.msra.mxu0 0.0
    %937 = vmatprep.subr.mxu0 0.0
    %938 = vmatpush1.msra.mxu0 0.0
    %939 = vmatprep.subr.mxu0 0.0
    %940 = vmatpush1.msra.mxu0 0.0
    %941 = vmatprep.subr.mxu0 0.0
    %942 = vmatpush1.msra.mxu0 0.0
    %943 = vmatprep.subr.mxu0 0.0
    %944 = vmatpush1.msra.mxu0 0.0
    %945 = vmatprep.subr.mxu0 0.0
    %946 = vmatpush1.msra.mxu0 0.0
    %947 = vmatprep.subr.mxu0 0.0
    %948 = vmatpush1.msra.mxu0 0.0
    %949 = vmatprep.mubr.f32.mxu0 0.0
    %950 = vmatmul.mubr.f32.gmra.mrb[0].mxu0 %v325
    %v951 = vpop.f32.mrb[0].mxu0
    %v952 = vadd.f32 %v322, %v951
    %v953 = vpop.f32.mrb[0].mxu0
    %v954 = vadd.f32 %v322, %v953
    %955 = vdwg.mxu0
    %v958 = vcombine.low %v952, %v954
    %v960 = vadd.f32 %v31, %v958
    %v961 = vtanh.pop %v960
    %v963 = vcombine.high %v961, %v961
    %v964 = vsel %vm87, %v961, 0
    %v966 = vsel %vm87, %v963, 0
    %968 = vmatprep.subr.mxu0 %v966
    %969 = vmatpush1.msra.mxu0 %v964
    %970 = vmatprep.subr.mxu0 0.0
    %971 = vmatpush1.msra.mxu0 0.0
    %972 = vmatprep.subr.mxu0 0.0
    %973 = vmatpush1.msra.mxu0 0.0
    %974 = vmatprep.subr.mxu0 0.0
    %975 = vmatpush1.msra.mxu0 0.0
    %976 = vmatprep.subr.mxu0 0.0
    %977 = vmatpush1.msra.mxu0 0.0
    %978 = vmatprep.subr.mxu0 0.0
    %979 = vmatpush1.msra.mxu0 0.0
    %980 = vmatprep.subr.mxu0 0.0
    %981 = vmatpush1.msra.mxu0 0.0
    %982 = vmatprep.subr.mxu0 0.0
    %983 = vmatpush1.msra.mxu0 0.0
    %984 = vmatprep.subr.mxu0 0.0
    %985 = vmatpush1.msra.mxu0 0.0
    %986 = vmatprep.subr.mxu0 0.0
    %987 = vmatpush1.msra.mxu0 0.0
    %988 = vmatprep.subr.mxu0 0.0
    %989 = vmatpush1.msra.mxu0 0.0
    %990 = vmatprep.subr.mxu0 0.0
    %991 = vmatpush1.msra.mxu0 0.0
    %992 = vmatprep.subr.mxu0 0.0
    %993 = vmatpush1.msra.mxu0 0.0
    %994 = vmatprep.subr.mxu0 0.0
    %995 = vmatpush1.msra.mxu0 0.0
    %996 = vmatprep.subr.mxu0 0.0
    %997 = vmatpush1.msra.mxu0 0.0
    %998 = vmatprep.subr.mxu0 0.0
    %999 = vmatpush1.msra.mxu0 0.0
    %1000 = vmatprep.subr.mxu0 0.0
    %1001 = vmatpush1.msra.mxu0 0.0
    %1002 = vmatprep.subr.mxu0 0.0
    %1003 = vmatpush1.msra.mxu0 0.0
    %1004 = vmatprep.subr.mxu0 0.0
    %1005 = vmatpush1.msra.mxu0 0.0
    %1006 = vmatprep.subr.mxu0 0.0
    %1007 = vmatpush1.msra.mxu0 0.0
    %1008 = vmatprep.subr.mxu0 0.0
    %1009 = vmatpush1.msra.mxu0 0.0
    %1010 = vmatprep.subr.mxu0 0.0
    %1011 = vmatpush1.msra.mxu0 0.0
    %1012 = vmatprep.subr.mxu0 0.0
    %1013 = vmatpush1.msra.mxu0 0.0
    %1014 = vmatprep.subr.mxu0 0.0
    %1015 = vmatpush1.msra.mxu0 0.0
    %1016 = vmatprep.subr.mxu0 0.0
    %1017 = vmatpush1.msra.mxu0 0.0
    %1018 = vmatprep.subr.mxu0 0.0
    %1019 = vmatpush1.msra.mxu0 0.0
    %1020 = vmatprep.subr.mxu0 0.0
    %1021 = vmatpush1.msra.mxu0 0.0
    %1022 = vmatprep.subr.mxu0 0.0
    %1023 = vmatpush1.msra.mxu0 0.0
    %1024 = vmatprep.subr.mxu0 0.0
    %1025 = vmatpush1.msra.mxu0 0.0
    %1026 = vmatprep.subr.mxu0 0.0
    %1027 = vmatpush1.msra.mxu0 0.0
    %1028 = vmatprep.subr.mxu0 0.0
    %1029 = vmatpush1.msra.mxu0 0.0
    %1030 = vmatprep.subr.mxu0 0.0
    %1031 = vmatpush1.msra.mxu0 0.0
    %1032 = vmatprep.mubr.f32.mxu0 0.0
    %1033 = vmatmul.mubr.f32.gmra.mrb[0].mxu0 %v76
    %v1034 = vpop.f32.mrb[0].mxu0
    %v1035 = vadd.f32 %v55, %v1034
    %v1036 = vpop.f32.mrb[0].mxu0
    %v1037 = vadd.f32 %v55, %v1036
    %1038 = vmatprep.mubr.f32.mxu0 0.0
    %1039 = vmatmul.mubr.f32.gmra.mrb[0].mxu0 %v79
    %v1040 = vpop.f32.mrb[0].mxu0
    %v1041 = vadd.f32 %v60, %v1040
    %v1042 = vpop.f32.mrb[0].mxu0
    %v1043 = vadd.f32 %v60, %v1042
    %1044 = vmatprep.mubr.f32.mxu0 0.0
    %1045 = vmatmul.mubr.f32.gmra.mrb[0].mxu0 %v82
    %v1046 = vpop.f32.mrb[0].mxu0
    %v1047 = vadd.f32 %v65, %v1046
    %v1048 = vpop.f32.mrb[0].mxu0
    %v1049 = vadd.f32 %v65, %v1048
    %1050 = vmatprep.mubr.f32.mxu0 0.0
    %1051 = vmatmul.mubr.f32.gmra.mrb[0].mxu0 %v85
    %v1052 = vpop.f32.mrb[0].mxu0
    %v1053 = vadd.f32 %v70, %v1052
    %v1054 = vpop.f32.mrb[0].mxu0
    %v1055 = vadd.f32 %v70, %v1054
    %1056 = vdwg.mxu0
    %v1057 = vtanh.pop %v1035
    %v1058 = vtanh.pop %v1037
    %v1059 = vtanh.pop %v1041
    %v1060 = vtanh.pop %v1043
    %v1061 = vtanh.pop %v1047
    %v1062 = vtanh.pop %v1049
    %v1063 = vtanh.pop %v1053
    %v1064 = vtanh.pop %v1055
    %1065 = vmatprep.subr.mxu0 %v1058
    %1066 = vmatpush1.msra.mxu0 %v1057
    %1067 = vmatprep.subr.mxu0 %v1060
    %1068 = vmatpush1.msra.mxu0 %v1059
    %1069 = vmatprep.subr.mxu0 %v1062
    %1070 = vmatpush1.msra.mxu0 %v1061
    %1071 = vmatprep.subr.mxu0 %v1064
    %1072 = vmatpush1.msra.mxu0 %v1063
    %1073 = vmatprep.subr.mxu0 0.0
    %1074 = vmatpush1.msra.mxu0 0.0
    %1075 = vmatprep.subr.mxu0 0.0
    %1076 = vmatpush1.msra.mxu0 0.0
    %1077 = vmatprep.subr.mxu0 0.0
    %1078 = vmatpush1.msra.mxu0 0.0
    %1079 = vmatprep.subr.mxu0 0.0
    %1080 = vmatpush1.msra.mxu0 0.0
    %1081 = vmatprep.subr.mxu0 0.0
    %1082 = vmatpush1.msra.mxu0 0.0
    %1083 = vmatprep.subr.mxu0 0.0
    %1084 = vmatpush1.msra.mxu0 0.0
    %1085 = vmatprep.subr.mxu0 0.0
    %1086 = vmatpush1.msra.mxu0 0.0
    %1087 = vmatprep.subr.mxu0 0.0
    %1088 = vmatpush1.msra.mxu0 0.0
    %1089 = vmatprep.subr.mxu0 0.0
    %1090 = vmatpush1.msra.mxu0 0.0
    %1091 = vmatprep.subr.mxu0 0.0
    %1092 = vmatpush1.msra.mxu0 0.0
    %1093 = vmatprep.subr.mxu0 0.0
    %1094 = vmatpush1.msra.mxu0 0.0
    %1095 = vmatprep.subr.mxu0 0.0
    %1096 = vmatpush1.msra.mxu0 0.0
    %1097 = vmatprep.subr.mxu0 0.0
    %1098 = vmatpush1.msra.mxu0 0.0
    %1099 = vmatprep.subr.mxu0 0.0
    %1100 = vmatpush1.msra.mxu0 0.0
    %1101 = vmatprep.subr.mxu0 0.0
    %1102 = vmatpush1.msra.mxu0 0.0
    %1103 = vmatprep.subr.mxu0 0.0
    %1104 = vmatpush1.msra.mxu0 0.0
    %1105 = vmatprep.subr.mxu0 0.0
    %1106 = vmatpush1.msra.mxu0 0.0
    %1107 = vmatprep.subr.mxu0 0.0
    %1108 = vmatpush1.msra.mxu0 0.0
    %1109 = vmatprep.subr.mxu0 0.0
    %1110 = vmatpush1.msra.mxu0 0.0
    %1111 = vmatprep.subr.mxu0 0.0
    %1112 = vmatpush1.msra.mxu0 0.0
    %1113 = vmatprep.subr.mxu0 0.0
    %1114 = vmatpush1.msra.mxu0 0.0
    %1115 = vmatprep.subr.mxu0 0.0
    %1116 = vmatpush1.msra.mxu0 0.0
    %1117 = vmatprep.subr.mxu0 0.0
    %1118 = vmatpush1.msra.mxu0 0.0
    %1119 = vmatprep.subr.mxu0 0.0
    %1120 = vmatpush1.msra.mxu0 0.0
    %1121 = vmatprep.subr.mxu0 0.0
    %1122 = vmatpush1.msra.mxu0 0.0
    %1123 = vmatprep.subr.mxu0 0.0
    %1124 = vmatpush1.msra.mxu0 0.0
    %1125 = vmatprep.subr.mxu0 0.0
    %1126 = vmatpush1.msra.mxu0 0.0
    %1127 = vmatprep.subr.mxu0 0.0
    %1128 = vmatpush1.msra.mxu0 0.0
    %1129 = vmatprep.mubr.f32.mxu0 0.0
    %1130 = vmatmul.mubr.f32.gmra.mrb[0].mxu0 %v211
    %v1131 = vpop.f32.mrb[0].mxu0
    %v1132 = vadd.f32 %v192, %v1131
    %v1133 = vpop.f32.mrb[0].mxu0
    %v1134 = vadd.f32 %v192, %v1133
    %1135 = vmatprep.mubr.f32.mxu0 0.0
    %1136 = vmatmul.mubr.f32.gmra.mrb[0].mxu0 %v214
    %v1137 = vpop.f32.mrb[0].mxu0
    %v1138 = vadd.f32 %v197, %v1137
    %v1139 = vpop.f32.mrb[0].mxu0
    %v1140 = vadd.f32 %v197, %v1139
    %1141 = vmatprep.mubr.f32.mxu0 0.0
    %1142 = vmatmul.mubr.f32.gmra.mrb[0].mxu0 %v217
    %v1143 = vpop.f32.mrb[0].mxu0
    %v1144 = vadd.f32 %v202, %v1143
    %v1145 = vpop.f32.mrb[0].mxu0
    %v1146 = vadd.f32 %v202, %v1145
    %1147 = vmatprep.mubr.f32.mxu0 0.0
    %1148 = vmatmul.mubr.f32.gmra.mrb[0].mxu0 %v220
    %v1149 = vpop.f32.mrb[0].mxu0
    %v1150 = vadd.f32 %v207, %v1149
    %v1151 = vpop.f32.mrb[0].mxu0
    %v1152 = vadd.f32 %v207, %v1151
    %1153 = vdwg.mxu0
    %v1154 = vtanh.pop %v1132
    %v1155 = vtanh.pop %v1134
    %v1156 = vtanh.pop %v1138
    %v1157 = vtanh.pop %v1140
    %v1158 = vtanh.pop %v1144
    %v1159 = vtanh.pop %v1146
    %v1160 = vtanh.pop %v1150
    %v1161 = vtanh.pop %v1152
    %1162 = vmatprep.subr.mxu0 %v1155
    %1163 = vmatpush1.msra.mxu0 %v1154
    %1164 = vmatprep.subr.mxu0 %v1157
    %1165 = vmatpush1.msra.mxu0 %v1156
    %1166 = vmatprep.subr.mxu0 %v1159
    %1167 = vmatpush1.msra.mxu0 %v1158
    %1168 = vmatprep.subr.mxu0 %v1161
    %1169 = vmatpush1.msra.mxu0 %v1160
    %1170 = vmatprep.subr.mxu0 0.0
    %1171 = vmatpush1.msra.mxu0 0.0
    %1172 = vmatprep.subr.mxu0 0.0
    %1173 = vmatpush1.msra.mxu0 0.0
    %1174 = vmatprep.subr.mxu0 0.0
    %1175 = vmatpush1.msra.mxu0 0.0
    %1176 = vmatprep.subr.mxu0 0.0
    %1177 = vmatpush1.msra.mxu0 0.0
    %1178 = vmatprep.subr.mxu0 0.0
    %1179 = vmatpush1.msra.mxu0 0.0
    %1180 = vmatprep.subr.mxu0 0.0
    %1181 = vmatpush1.msra.mxu0 0.0
    %1182 = vmatprep.subr.mxu0 0.0
    %1183 = vmatpush1.msra.mxu0 0.0
    %1184 = vmatprep.subr.mxu0 0.0
    %1185 = vmatpush1.msra.mxu0 0.0
    %1186 = vmatprep.subr.mxu0 0.0
    %1187 = vmatpush1.msra.mxu0 0.0
    %1188 = vmatprep.subr.mxu0 0.0
    %1189 = vmatpush1.msra.mxu0 0.0
    %1190 = vmatprep.subr.mxu0 0.0
    %1191 = vmatpush1.msra.mxu0 0.0
    %1192 = vmatprep.subr.mxu0 0.0
    %1193 = vmatpush1.msra.mxu0 0.0
    %1194 = vmatprep.subr.mxu0 0.0
    %1195 = vmatpush1.msra.mxu0 0.0
    %1196 = vmatprep.subr.mxu0 0.0
    %1197 = vmatpush1.msra.mxu0 0.0
    %1198 = vmatprep.subr.mxu0 0.0
    %1199 = vmatpush1.msra.mxu0 0.0
    %1200 = vmatprep.subr.mxu0 0.0
    %1201 = vmatpush1.msra.mxu0 0.0
    %1202 = vmatprep.subr.mxu0 0.0
    %1203 = vmatpush1.msra.mxu0 0.0
    %1204 = vmatprep.subr.mxu0 0.0
    %1205 = vmatpush1.msra.mxu0 0.0
    %1206 = vmatprep.subr.mxu0 0.0
    %1207 = vmatpush1.msra.mxu0 0.0
    %1208 = vmatprep.subr.mxu0 0.0
    %1209 = vmatpush1.msra.mxu0 0.0
    %1210 = vmatprep.subr.mxu0 0.0
    %1211 = vmatpush1.msra.mxu0 0.0
    %1212 = vmatprep.subr.mxu0 0.0
    %1213 = vmatpush1.msra.mxu0 0.0
    %1214 = vmatprep.subr.mxu0 0.0
    %1215 = vmatpush1.msra.mxu0 0.0
    %1216 = vmatprep.subr.mxu0 0.0
    %1217 = vmatpush1.msra.mxu0 0.0
    %1218 = vmatprep.subr.mxu0 0.0
    %1219 = vmatpush1.msra.mxu0 0.0
    %1220 = vmatprep.subr.mxu0 0.0
    %1221 = vmatpush1.msra.mxu0 0.0
    %1222 = vmatprep.subr.mxu0 0.0
    %1223 = vmatpush1.msra.mxu0 0.0
    %1224 = vmatprep.subr.mxu0 0.0
    %1225 = vmatpush1.msra.mxu0 0.0
    %1226 = vmatprep.mubr.f32.mxu0 0.0
    %1227 = vmatmul.mubr.f32.gmra.mrb[0].mxu0 %v325
    %v1228 = vpop.f32.mrb[0].mxu0
    %v1229 = vadd.f32 %v322, %v1228
    %v1230 = vpop.f32.mrb[0].mxu0
    %v1231 = vadd.f32 %v322, %v1230
    %1232 = vdwg.mxu0
    %v1233 = vadd.f32 %v673, %v952
    %v1234 = vadd.f32 %v675, %v954
    %v1235 = vmul.f32 %v1233, 2.0
    %v1236 = vmul.f32 %v1234, 2.0
    %v1237 = vadd.f32 %v394, %v1235
    %v1238 = vadd.f32 %v396, %v1236
    %v1239 = vadd.f32 %v1237, %v1229
    %v1240 = vadd.f32 %v1238, %v1231
    %v1241 = vstv %s50
    %v1242 = vmul.f32 %v1241, %v1239
    %v1243 = vmul.f32 %v1241, %v1240
    %v1246 = vcombine.low %v1242, %v1243
    %v1248 = vadd.f32 %v31, %v1246
    %1249 = vst [vmem:[#allocation3] sm:$0xff] %v1248
    // Predicated region
    $region34: #{_rk4_call.1} parent=1 // pred_check
      _
    $region35: #{_rk4_call.1} parent=1 // pred_check_branch
      %1251 = sbr.rel (0) target = $region37
    $region36: #{_rk4_call.1} parent=1 // pred_region
      %s1253 = ssub.s32 128, 128
      %1254 = vsyncadd [#allocation4], %s1253
      %s1256 = sshll.u32 [#allocation3], 4
      %s1257 = int_to_ptr.vmem [resolvable:$true] %s1256
      %1259 = dma.vmem_to_hbm [thread:$0]  %s1257, 128, %s8, [#allocation4]
    $region37: #{_rk4_call.1} parent=1 // pred_fallthru
      _
    // Predicated region
    $region38: #{_rk4_call.1} parent=1 // pred_check
      _
    $region39: #{_rk4_call.1} parent=1 // pred_check_branch
      %1261 = sbr.rel (0) target = $region41
    $region40: #{_rk4_call.1} parent=1 // pred_region
      %1262 = dma.done [#allocation4], 128
    $region41: #{_rk4_call.1} parent=1 // pred_fallthru
      _
    %1263 = vsyncpa [#allocation4], 1

</llo_original>
